<compile_context>
chip_gen: v5e
topology: v5e:2x2
jax: 0.10.0
libtpu: 0.0.40
codegen_flags: <defaults>
</compile_context>

<pallas_src>
import functools

import jax
import jax.numpy as jnp
from jax.experimental import pallas as pl
from jax.experimental.pallas import tpu as pltpu

EPS = 1e-06
LANES = 128
SUBLANES = 8


def _dice_kernel(x_ref, t_ref, out_ref):
    """Accumulates (8,128) lane/sublane partials of x*t and x+t.

    out_ref block is (1, 2, 8, 128) f32 and maps to the same block index for
    every step of the inner (reduction) grid axis, so it stays resident in
    VMEM and acts as the accumulator. Inner loop is pure VPU adds; the
    cross-lane reduction happens once, outside the kernel.
    """
    i = pl.program_id(1)

    @pl.when(i == 0)
    def _():
        out_ref[...] = jnp.zeros_like(out_ref)

    x = x_ref[...].astype(jnp.float32)
    t = t_ref[...].astype(jnp.float32)

    g = x.shape[0] // SUBLANES  # tile_r is always a multiple of 8
    prod = jnp.sum((x * t).reshape(g, SUBLANES, LANES), axis=0)  # intersection
    both = jnp.sum((x + t).reshape(g, SUBLANES, LANES), axis=0)  # sum(x)+sum(t)

    out_ref[0, 0] += prod
    out_ref[0, 1] += both


@functools.partial(jax.jit, static_argnames=("tile_rows",))
def dice_loss(outputs, targets, tile_rows=2048):
    """Equivalent to DiceLoss()(outputs, targets) (per_image=False)."""
    x = outputs.reshape(-1)
    t = targets.reshape(-1)
    n = x.shape[0]

    # Round the requested tile to a sublane multiple.
    tile_rows = max(SUBLANES, (tile_rows // SUBLANES) * SUBLANES)

    rows = n // LANES
    tile_r = min(tile_rows, (rows // SUBLANES) * SUBLANES)

    if tile_r == 0:
        # Degenerate tiny input (< 1024 elements): pure-JAX path.
        xf = x.astype(jnp.float32)
        tf = t.astype(jnp.float32)
        inter = jnp.sum(xf * tf)
        union = jnp.sum(xf) + jnp.sum(tf) + EPS
        return 1.0 - (2.0 * inter + EPS) / union

    n_full = rows // tile_r           # number of full (tile_r, 128) tiles
    rows_main = n_full * tile_r
    main_elems = rows_main * LANES    # elements handled by the kernel

    # Megacore split (v7x): leading "parallel" axis over row-tiles, each
    # partition accumulates into its own output block. Serial on 1-TC chips.
    n_outer = 2 if (n_full >= 2 and n_full % 2 == 0) else 1
    n_inner = n_full // n_outer

    # No jnp.pad and no astype copies: in the common case (n divisible by the
    # tile) this is a free reshape of the original buffers.
    if main_elems == n:
        x_main, t_main = x, t
    else:
        x_main, t_main = x[:main_elems], t[:main_elems]
    x2 = x_main.reshape(rows_main, LANES)
    t2 = t_main.reshape(rows_main, LANES)

    partials = pl.pallas_call(
        _dice_kernel,
        out_shape=jax.ShapeDtypeStruct((n_outer, 2, SUBLANES, LANES),
                                       jnp.float32),
        grid_spec=pltpu.PrefetchScalarGridSpec(
            num_scalar_prefetch=0,
            grid=(n_outer, n_inner),
            in_specs=[
                pl.BlockSpec((tile_r, LANES),
                             lambda o, i: (o * n_inner + i, 0)),
                pl.BlockSpec((tile_r, LANES),
                             lambda o, i: (o * n_inner + i, 0)),
            ],
            out_specs=pl.BlockSpec((1, 2, SUBLANES, LANES),
                                   lambda o, i: (o, 0, 0, 0)),
        ),
        compiler_params=pltpu.CompilerParams(
            dimension_semantics=("parallel", "arbitrary")),
    )(x2, t2)

    intersection = jnp.sum(partials[:, 0])
    total = jnp.sum(partials[:, 1])  # sum(x) + sum(t)

    # Ragged tail (< one tile): reduced in plain JAX (fused slice+reduce).
    if main_elems != n:
        xt = x[main_elems:].astype(jnp.float32)
        tt = t[main_elems:].astype(jnp.float32)
        intersection = intersection + jnp.sum(xt * tt)
        total = total + jnp.sum(xt + tt)

    union = total + EPS
    return 1.0 - (2.0 * intersection + EPS) / union


def dice_loss_ref(outputs, targets):
    # pure-JAX reference of soft_dice_loss(per_image=False)
    x = outputs.astype(jnp.float32).reshape(-1)
    t = targets.astype(jnp.float32).reshape(-1)
    intersection = jnp.sum(x * t)
    union = jnp.sum(x) + jnp.sum(t) + EPS
    return 1.0 - (2.0 * intersection + EPS) / union


if __name__ == "__main__":
    key = jax.random.PRNGKey(0)
    k1, k2 = jax.random.split(key)

    # NCHW inputs, as the PyTorch module would receive
    # (e.g. sigmoid probabilities vs. a binary mask).
    outputs = jax.nn.sigmoid(jax.random.normal(k1, (2, 4, 16, 16), jnp.float32))
    targets = (jax.random.uniform(k2, (2, 4, 16, 16)) > 0.5).astype(jnp.float32)

    loss = dice_loss(outputs, targets)
    jax.block_until_ready(loss)

    ref = dice_loss_ref(outputs, targets)
    assert jnp.allclose(loss, ref, rtol=1e-5, atol=1e-6), (loss, ref)
    print("KERNEL_OK")
</pallas_src>

<mosaic_0001>
module attributes {stable_mosaic.version = 11 : i64} {
  func.func @_dice_kernel(%arg0: i32, %arg1: i32, %arg2: memref<16x128xf32, #tpu.memory_space<vmem>>, %arg3: memref<16x128xf32, #tpu.memory_space<vmem>>, %arg4: memref<1x2x8x128xf32, #tpu.memory_space<vmem>>) attributes {dimension_semantics = [#tpu.dimension_semantics<parallel>, #tpu.dimension_semantics<arbitrary>], iteration_bounds = array<i64: 1, 1>, scalar_prefetch = 0 : i64, scratch_operands = 0 : i64, tpu.core_type = #tpu.core_type<tc>, window_params = [{transform_indices = @transform_0, window_bounds = array<i64: 16, 128>}, {transform_indices = @transform_1, window_bounds = array<i64: 16, 128>}, {transform_indices = @transform_2, window_bounds = array<i64: 1, 2, 8, 128>}]} {
    %c0_i32 = arith.constant 0 : i32
    %0 = arith.cmpi eq, %arg1, %c0_i32 : i32
    %1 = arith.extui %0 : i1 to i32
    %c0_i32_0 = arith.constant 0 : i32
    %2 = arith.cmpi ne, %1, %c0_i32_0 : i32
    scf.if %2 {
      %cst_20 = arith.constant 0.000000e+00 : f32
      %23 = vector.broadcast %cst_20 : f32 to vector<1x2x8x128xf32>
      %c0_21 = arith.constant 0 : index
      %c0_22 = arith.constant 0 : index
      %c0_23 = arith.constant 0 : index
      %c0_24 = arith.constant 0 : index
      %24 = vector.load %arg4[%c0_21, %c0_22, %c0_23, %c0_24] : memref<1x2x8x128xf32, #tpu.memory_space<vmem>>, vector<1x2x8x128xf32>
      tpu.vector_store %arg4[%c0_21, %c0_22, %c0_23, %c0_24], %23 {strides = array<i32>} : memref<1x2x8x128xf32, #tpu.memory_space<vmem>>, vector<1x2x8x128xf32>,
    } else {
    }
    %c0 = arith.constant 0 : index
    %c0_1 = arith.constant 0 : index
    %3 = vector.load %arg2[%c0, %c0_1] : memref<16x128xf32, #tpu.memory_space<vmem>>, vector<16x128xf32>
    %c0_2 = arith.constant 0 : index
    %c0_3 = arith.constant 0 : index
    %4 = vector.load %arg3[%c0_2, %c0_3] : memref<16x128xf32, #tpu.memory_space<vmem>>, vector<16x128xf32>
    %5 = arith.mulf %3, %4 : vector<16x128xf32>
    %6 = vector.shape_cast %5 : vector<16x128xf32> to vector<2x8x128xf32>
    %cst = arith.constant dense<0.000000e+00> : vector<8x128xf32>
    %7 = vector.multi_reduction <add>, %6, %cst [0] : vector<2x8x128xf32> to vector<8x128xf32>
    %8 = arith.addf %3, %4 : vector<16x128xf32>
    %9 = vector.shape_cast %8 : vector<16x128xf32> to vector<2x8x128xf32>
    %cst_4 = arith.constant dense<0.000000e+00> : vector<8x128xf32>
    %10 = vector.multi_reduction <add>, %9, %cst_4 [0] : vector<2x8x128xf32> to vector<8x128xf32>
    %c0_5 = arith.constant 0 : index
    %c0_6 = arith.constant 0 : index
    %c0_7 = arith.constant 0 : index
    %c0_8 = arith.constant 0 : index
    %11 = vector.load %arg4[%c0_5, %c0_6, %c0_7, %c0_8] : memref<1x2x8x128xf32, #tpu.memory_space<vmem>>, vector<1x1x8x128xf32>
    %12 = vector.shape_cast %11 : vector<1x1x8x128xf32> to vector<8x128xf32>
    %13 = arith.addf %12, %7 : vector<8x128xf32>
    %c0_9 = arith.constant 0 : index
    %c0_10 = arith.constant 0 : index
    %c0_11 = arith.constant 0 : index
    %c0_12 = arith.constant 0 : index
    %14 = vector.load %arg4[%c0_9, %c0_10, %c0_11, %c0_12] : memref<1x2x8x128xf32, #tpu.memory_space<vmem>>, vector<1x1x8x128xf32>
    %15 = vector.shape_cast %14 : vector<1x1x8x128xf32> to vector<8x128xf32>
    %16 = vector.shape_cast %13 : vector<8x128xf32> to vector<1x1x8x128xf32>
    tpu.vector_store %arg4[%c0_9, %c0_10, %c0_11, %c0_12], %16 {strides = array<i32>} : memref<1x2x8x128xf32, #tpu.memory_space<vmem>>, vector<1x1x8x128xf32>,
    %c0_13 = arith.constant 0 : index
    %c1 = arith.constant 1 : index
    %c0_14 = arith.constant 0 : index
    %c0_15 = arith.constant 0 : index
    %17 = vector.load %arg4[%c0_13, %c1, %c0_14, %c0_15] : memref<1x2x8x128xf32, #tpu.memory_space<vmem>>, vector<1x1x8x128xf32>
    %18 = vector.shape_cast %17 : vector<1x1x8x128xf32> to vector<8x128xf32>
    %19 = arith.addf %18, %10 : vector<8x128xf32>
    %c0_16 = arith.constant 0 : index
    %c1_17 = arith.constant 1 : index
    %c0_18 = arith.constant 0 : index
    %c0_19 = arith.constant 0 : index
    %20 = vector.load %arg4[%c0_16, %c1_17, %c0_18, %c0_19] : memref<1x2x8x128xf32, #tpu.memory_space<vmem>>, vector<1x1x8x128xf32>
    %21 = vector.shape_cast %20 : vector<1x1x8x128xf32> to vector<8x128xf32>
    %22 = vector.shape_cast %19 : vector<8x128xf32> to vector<1x1x8x128xf32>
    tpu.vector_store %arg4[%c0_16, %c1_17, %c0_18, %c0_19], %22 {strides = array<i32>} : memref<1x2x8x128xf32, #tpu.memory_space<vmem>>, vector<1x1x8x128xf32>,
    return
  }
  func.func @transform_0(%arg0: i32, %arg1: i32) -> (i32, i32) {
    %c1_i32 = arith.constant 1 : i32
    %0 = arith.muli %arg0, %c1_i32 : i32
    %1 = arith.addi %0, %arg1 : i32
    %c0_i32 = arith.constant 0 : i32
    %c0_i32_0 = arith.constant 0 : i32
    return %1, %c0_i32 : i32, i32
  }
  func.func @transform_1(%arg0: i32, %arg1: i32) -> (i32, i32) {
    %c1_i32 = arith.constant 1 : i32
    %0 = arith.muli %arg0, %c1_i32 : i32
    %1 = arith.addi %0, %arg1 : i32
    %c0_i32 = arith.constant 0 : i32
    %c0_i32_0 = arith.constant 0 : i32
    return %1, %c0_i32 : i32, i32
  }
  func.func @transform_2(%arg0: i32, %arg1: i32) -> (i32, i32, i32, i32) {
    %c0_i32 = arith.constant 0 : i32
    %c0_i32_0 = arith.constant 0 : i32
    %c0_i32_1 = arith.constant 0 : i32
    %c0_i32_2 = arith.constant 0 : i32
    return %arg0, %c0_i32, %c0_i32_0, %c0_i32_1 : i32, i32, i32, i32
  }
}

</mosaic_0001>

<llo_original>
// kernel: dice_loss.1
$region0: #{dice_loss.1}
  #allocation0 [shape = 'u32[]', space=smem, size = 0x4, offset = 0x4, fixed_abs, tag = 'smem constant byte address 0x4 - core index']
  #allocation1 [shape = 'u32[72,128]{1,0:T(1,128)}', space=vmem, size = 0x9000, scoped, tag = 'internal scratch']
  %s0 = inlined_call_operand.vmem [shape: f32[16,128], index: 0, kind: input, shape index: {}]
  %s1 = inlined_call_operand.vmem [shape: f32[16,128], index: 1, kind: input, shape index: {}]
  %s2 = inlined_call_operand.vmem [shape: f32[1,2,8,128], index: 2, kind: output, shape index: {}]
  %s3 = sld [smem:[#allocation0]]
  $region22: #{dice_loss.1} parent=0
    _
  %s5 = ssub.s32 1, %s3
  %s6 = scalar_select 0, %s5, %s3
  // Predicated region
  $region2: #{dice_loss.1} parent=0 // pred_check
    _
  $region3: #{dice_loss.1} parent=0 // pred_check_branch
    %8 = sbr.rel (0) target = $region5
  $region4: #{dice_loss.1} parent=0 // pred_region
    %s9 = sadd.s32 0, 0
    %s10 = smul.u32 2, %s9
    %p11 = scmp.lt.s32.totalorder %s10, 1
    %s12 = scalar_select %p11, %s10, 1
    %s13 = smul.addr %s12, 8
    %s14 = scalar_lea.vmem %s0, %s13
    %s15 = sadd.s32 0, 0
    %s16 = smul.u32 2, %s15
  $region5: #{dice_loss.1} parent=0 // pred_fallthru
    _
  // Predicated region
  $region6: #{dice_loss.1} parent=0 // pred_check
    _
  $region7: #{dice_loss.1} parent=0 // pred_check_branch
    %18 = sbr.rel (0) target = $region9
  $region8: #{dice_loss.1} parent=0 // pred_region
    %s19 = sadd.s32 0, 0
    %s20 = smul.u32 2, %s19
    %p21 = scmp.lt.s32.totalorder %s20, 1
    %s22 = scalar_select %p21, %s20, 1
    %s23 = smul.addr %s22, 8
    %s24 = scalar_lea.vmem %s1, %s23
    %s25 = sadd.s32 0, 0
    %s26 = smul.u32 2, %s25
  $region9: #{dice_loss.1} parent=0 // pred_fallthru
    _
  %s27 = sadd.s32 0, 0
  %s28 = smul.u32 2, %s27
  %p29 = scmp.lt.s32.totalorder %s28, 1
  %s30 = scalar_select %p29, %s28, 1
  %s31 = smul.addr %s30, 8
  %s32 = scalar_lea.vmem %s0, %s31
  %s33 = sadd.s32 0, 0
  %s34 = smul.u32 2, %s33
  %p35 = scmp.lt.s32.totalorder %s34, 1
  %s36 = scalar_select %p35, %s34, 1
  %s37 = smul.addr %s36, 8
  %s38 = scalar_lea.vmem %s1, %s37
  %s39 = sadd.s32 0, 0
  %s40 = smul.u32 2, %s39
  %p41 = scmp.lt.s32.totalorder %s40, 1
  %s42 = scalar_select %p41, %s40, 1
  %s43 = smul.addr %s42, 8
  %s44 = scalar_lea.vmem %s0, %s43
  %s45 = sadd.s32 0, 0
  %s46 = smul.u32 2, %s45
  %s47 = sadd.s32 0, 0
  %s48 = smul.u32 2, %s47
  %p49 = scmp.lt.s32.totalorder %s48, 1
  %s50 = scalar_select %p49, %s48, 1
  %s51 = smul.addr %s50, 8
  %s52 = scalar_lea.vmem %s1, %s51
  %s53 = sadd.s32 0, 0
  %s54 = smul.u32 2, %s53
  %p55 = scmp.eq.s32.totalorder 0, 0
  // Predicated region
  $region10: #{dice_loss.1} parent=0 // pred_check
    %p56 = pneg %p55
  $region11: #{dice_loss.1} parent=0 // pred_check_branch
    %58 = sbr.rel (%p56) target = $region13
  $region12: #{dice_loss.1} parent=0 // pred_region
    %59 = vst [vmem:[%s2] sm:$0xff] 0.0
    %60 = vst [vmem:[%s2 + $0x8] sm:$0xff] 0.0
  $region13: #{dice_loss.1} parent=0 // pred_fallthru
    _
  %v61 = vld [vmem:[%s44] sm:$0xff]
  %v62 = vld [vmem:[%s44 + $0x8] sm:$0xff]
  %v63 = vld [vmem:[%s52] sm:$0xff]
  %v64 = vld [vmem:[%s52 + $0x8] sm:$0xff]
  %v65 = vmul.f32 %v61, %v63
  %v66 = vmul.f32 %v62, %v64
  %v67 = vadd.f32 %v65, %v66
  %v68 = vadd.f32 %v61, %v63
  %v69 = vadd.f32 %v62, %v64
  %v70 = vadd.f32 %v68, %v69
  %v71 = vld [vmem:[%s2] sm:$0xff]
  %v72 = vadd.f32 %v71, %v67
  %73 = vst [vmem:[%s2] sm:$0xff] %v72
  %s74 = scalar_lea.vmem %s2, 8
  %v75 = vld [vmem:[%s74] sm:$0xff]
  %v76 = vadd.f32 %v75, %v70
  %77 = vst [vmem:[%s74] sm:$0xff] %v76
  // Predicated region
  $region14: #{dice_loss.1} parent=0 // pred_check
    _
  $region15: #{dice_loss.1} parent=0 // pred_check_branch
    %79 = sbr.rel (0) target = $region17
  $region16: #{dice_loss.1} parent=0 // pred_region
    _
  $region17: #{dice_loss.1} parent=0 // pred_fallthru
    _
  // Predicated region
  $region18: #{dice_loss.1} parent=0 // pred_check
    _
  $region19: #{dice_loss.1} parent=0 // pred_check_branch
    %81 = sbr.rel (0) target = $region21
  $region20: #{dice_loss.1} parent=0 // pred_region
    _
  $region21: #{dice_loss.1} parent=0 // pred_fallthru
    _

</llo_original>
